<compile_context>
chip_gen: v5e
topology: v5e:2x2
jax: 0.10.0
libtpu: 0.0.40
codegen_flags: <defaults>
</compile_context>

<pallas_src>
import functools

import jax
import jax.numpy as jnp
from jax.experimental import pallas as pl
from jax.experimental.pallas import tpu as pltpu


def _round_up(x, m):
    return (x + m - 1) // m * m


def _make_sine_layer_kernel(f):
    """Builds the kernel body; `f` (in_features) is a trace-time constant."""
    fuse_k = (f % 128 == 0)  # lane-aligned concat -> single K=3F MXU pass

    def kernel(x_ref, w_ref, b_ref, o_ref):
        # x_ref: (TM, F) f32       input rows (un-tiled, un-padded)
        # w_ref: (3F, O) bf16      packed weight = weight.T
        # b_ref: (1, O)  f32       bias
        # o_ref: (TM, O) f32       output
        x = x_ref[...]
        s = jnp.sin(x)
        c = jnp.cos(x)
        s2 = 2.0 * s * c                 # sin(2x)
        s3 = s * (3.0 - 4.0 * (s * s))   # sin(3x)

        if fuse_k:
            # Lane-aligned concat -> one fused K=3F bf16 matmul, f32 accumulate.
            a = jnp.concatenate([s, s2, s3], axis=-1).astype(jnp.bfloat16)
            acc = jnp.dot(a, w_ref[...], preferred_element_type=jnp.float32)
        else:
            # Small / unaligned F: three dots against sublane slices of W.
            acc = jnp.dot(s.astype(jnp.bfloat16), w_ref[0:f, :],
                          preferred_element_type=jnp.float32)
            acc = acc + jnp.dot(s2.astype(jnp.bfloat16), w_ref[f:2 * f, :],
                                preferred_element_type=jnp.float32)
            acc = acc + jnp.dot(s3.astype(jnp.bfloat16), w_ref[2 * f:3 * f, :],
                                preferred_element_type=jnp.float32)

        o_ref[...] = (acc + b_ref[...]).astype(o_ref.dtype)

    return kernel


def pack_sine_layer_params(weight, bias):
    """One-off (per-layer, not per-call) packing of the nn.Linear parameters.

    weight: (O, 3F) f32 (PyTorch nn.Linear layout), bias: (O,) f32.
    Returns w_packed: (3F, O) bf16, b_packed: (1, O) f32.
    """
    w_packed = weight.T.astype(jnp.bfloat16)           # (3F, O)
    b_packed = bias.reshape(1, -1).astype(jnp.float32)  # (1, O)
    return w_packed, b_packed


@functools.partial(jax.jit, static_argnames=("tm_cap",))
def sine_layer(x, w_packed, b_packed, *, tm_cap=1024):
    """x: (N, F) f32; w_packed: (3F, O) bf16; b_packed: (1, O) f32."""
    n, f = x.shape
    k3, o = w_packed.shape
    assert k3 == 3 * f
    assert b_packed.shape == (1, o)

    # Row tile: multiple of 8, capped, and (when there is enough work) split so
    # the grid has >= 2 steps for the v7x two-TensorCore "parallel" sharding.
    tm = min(tm_cap, _round_up(n, 8))
    if n > 8 and pl.cdiv(n, tm) < 2:
        tm = _round_up(pl.cdiv(n, 2), 8)
    grid = (pl.cdiv(n, tm),)  # ragged last block OK: OOB rows dropped on store

    kernel = _make_sine_layer_kernel(f)

    out = pl.pallas_call(
        kernel,
        out_shape=jax.ShapeDtypeStruct((n, o), jnp.float32),
        grid=grid,
        in_specs=[
            pl.BlockSpec((tm, f), lambda i: (i, 0)),        # x row tile
            pl.BlockSpec((k3, o), lambda i: (0, 0)),        # W, VMEM-resident
            pl.BlockSpec((1, o), lambda i: (0, 0)),         # bias, resident
        ],
        out_specs=pl.BlockSpec((tm, o), lambda i: (i, 0)),
        compiler_params=pltpu.CompilerParams(
            dimension_semantics=("parallel",),
        ),
    )(x, w_packed, b_packed)

    return out


if __name__ == "__main__":
    # Small shapes consistent with the module: batch=8, in_features=32, out=32.
    N, IN_FEATURES, OUT_FEATURES = 8, 32, 32

    key = jax.random.PRNGKey(0)
    kx, kw, kb = jax.random.split(key, 3)

    x = jax.random.normal(kx, (N, IN_FEATURES), dtype=jnp.float32)

    # Deterministic synthetic parameters (nn.Linear(3*IN, OUT) shapes).
    bound = 1.0 / jnp.sqrt(3.0 * IN_FEATURES)
    weight = jax.random.uniform(
        kw, (OUT_FEATURES, 3 * IN_FEATURES), jnp.float32, -bound, bound
    )
    bias = jax.random.uniform(kb, (OUT_FEATURES,), jnp.float32, -bound, bound)

    # Pack the parameters once (hoisted out of the per-call path).
    w_packed, b_packed = pack_sine_layer_params(weight, bias)

    out = sine_layer(x, w_packed, b_packed)
    out = jax.block_until_ready(out)

    # Reference in plain JAX (same math as the PyTorch forward, f32 throughout).
    omega_ref = jnp.repeat(
        jnp.array([1.0, 2.0, 3.0], jnp.float32), IN_FEATURES
    ).reshape(1, -1)
    x_tiled = jnp.concatenate([x, x, x], axis=1)
    ref = jnp.sin(x_tiled * omega_ref) @ weight.T + bias

    assert out.shape == (N, OUT_FEATURES)
    # bf16 MXU operands (f32 accumulation) -> tolerance ~ bf16 eps of operands.
    assert jnp.allclose(out, ref, atol=2e-2, rtol=2e-2)

    print("KERNEL_OK")
</pallas_src>

<mosaic_0001>
module attributes {stable_mosaic.version = 11 : i64} {
  func.func @kernel(%arg0: i32, %arg1: memref<8x32xf32, #tpu.memory_space<vmem>>, %arg2: memref<96x32xbf16, #tpu.memory_space<vmem>>, %arg3: memref<1x32xf32, #tpu.memory_space<vmem>>, %arg4: memref<8x32xf32, #tpu.memory_space<vmem>>) attributes {dimension_semantics = [#tpu.dimension_semantics<parallel>], iteration_bounds = array<i64: 1>, scalar_prefetch = 0 : i64, scratch_operands = 0 : i64, tpu.core_type = #tpu.core_type<tc>, window_params = [{transform_indices = @transform_0, window_bounds = array<i64: 8, 32>}, {pipeline_mode = #tpu.pipeline_mode<synchronous>, transform_indices = @transform_1, window_bounds = array<i64: 96, 32>}, {pipeline_mode = #tpu.pipeline_mode<synchronous>, transform_indices = @transform_2, window_bounds = array<i64: 1, 32>}, {transform_indices = @transform_3, window_bounds = array<i64: 8, 32>}]} {
    %c0 = arith.constant 0 : index
    %c0_0 = arith.constant 0 : index
    %0 = vector.load %arg1[%c0, %c0_0] : memref<8x32xf32, #tpu.memory_space<vmem>>, vector<8x32xf32>
    %1 = math.sin %0 : vector<8x32xf32>
    %2 = math.cos %0 : vector<8x32xf32>
    %cst = arith.constant 2.000000e+00 : f32
    %3 = vector.broadcast %cst : f32 to vector<8x32xf32>
    %4 = arith.mulf %3, %1 : vector<8x32xf32>
    %5 = arith.mulf %4, %2 : vector<8x32xf32>
    %6 = arith.mulf %1, %1 : vector<8x32xf32>
    %cst_1 = arith.constant 4.000000e+00 : f32
    %7 = vector.broadcast %cst_1 : f32 to vector<8x32xf32>
    %8 = arith.mulf %7, %6 : vector<8x32xf32>
    %cst_2 = arith.constant 3.000000e+00 : f32
    %9 = vector.broadcast %cst_2 : f32 to vector<8x32xf32>
    %10 = arith.subf %9, %8 : vector<8x32xf32>
    %11 = arith.mulf %1, %10 : vector<8x32xf32>
    %12 = arith.truncf %1 : vector<8x32xf32> to vector<8x32xbf16>
    %c0_3 = arith.constant 0 : index
    %c0_4 = arith.constant 0 : index
    %13 = vector.load %arg2[%c0_3, %c0_4] : memref<96x32xbf16, #tpu.memory_space<vmem>>, vector<32x32xbf16>
    %cst_5 = arith.constant dense<0.000000e+00> : vector<8x32xf32>
    %14 = tpu.matmul %12, %13, %cst_5 {dimension_numbers = #tpu.dot_dimension_numbers<[1], [0], [0], [1], [0, 0, 1, 1], [], []>} : vector<8x32xbf16>, vector<32x32xbf16>, vector<8x32xf32> -> vector<8x32xf32>
    %15 = arith.truncf %5 : vector<8x32xf32> to vector<8x32xbf16>
    %c32 = arith.constant 32 : index
    %c0_6 = arith.constant 0 : index
    %16 = vector.load %arg2[%c32, %c0_6] : memref<96x32xbf16, #tpu.memory_space<vmem>>, vector<32x32xbf16>
    %cst_7 = arith.constant dense<0.000000e+00> : vector<8x32xf32>
    %17 = tpu.matmul %15, %16, %cst_7 {dimension_numbers = #tpu.dot_dimension_numbers<[1], [0], [0], [1], [0, 0, 1, 1], [], []>} : vector<8x32xbf16>, vector<32x32xbf16>, vector<8x32xf32> -> vector<8x32xf32>
    %18 = arith.addf %14, %17 : vector<8x32xf32>
    %19 = arith.truncf %11 : vector<8x32xf32> to vector<8x32xbf16>
    %c64 = arith.constant 64 : index
    %c0_8 = arith.constant 0 : index
    %20 = vector.load %arg2[%c64, %c0_8] : memref<96x32xbf16, #tpu.memory_space<vmem>>, vector<32x32xbf16>
    %cst_9 = arith.constant dense<0.000000e+00> : vector<8x32xf32>
    %21 = tpu.matmul %19, %20, %cst_9 {dimension_numbers = #tpu.dot_dimension_numbers<[1], [0], [0], [1], [0, 0, 1, 1], [], []>} : vector<8x32xbf16>, vector<32x32xbf16>, vector<8x32xf32> -> vector<8x32xf32>
    %22 = arith.addf %18, %21 : vector<8x32xf32>
    %c0_10 = arith.constant 0 : index
    %c0_11 = arith.constant 0 : index
    %23 = vector.load %arg3[%c0_10, %c0_11] : memref<1x32xf32, #tpu.memory_space<vmem>>, vector<1x32xf32>
    %24 = vector.broadcast %23 : vector<1x32xf32> to vector<8x32xf32>
    %25 = arith.addf %22, %24 : vector<8x32xf32>
    %c0_12 = arith.constant 0 : index
    %c0_13 = arith.constant 0 : index
    %26 = vector.load %arg4[%c0_12, %c0_13] : memref<8x32xf32, #tpu.memory_space<vmem>>, vector<8x32xf32>
    tpu.vector_store %arg4[%c0_12, %c0_13], %25 {strides = array<i32>} : memref<8x32xf32, #tpu.memory_space<vmem>>, vector<8x32xf32>,
    return
  }
  func.func @transform_0(%arg0: i32) -> (i32, i32) {
    %c0_i32 = arith.constant 0 : i32
    %c0_i32_0 = arith.constant 0 : i32
    return %arg0, %c0_i32 : i32, i32
  }
  func.func @transform_1(%arg0: i32) -> (i32, i32) {
    %c0_i32 = arith.constant 0 : i32
    %c0_i32_0 = arith.constant 0 : i32
    %c0_i32_1 = arith.constant 0 : i32
    return %c0_i32, %c0_i32_0 : i32, i32
  }
  func.func @transform_2(%arg0: i32) -> (i32, i32) {
    %c0_i32 = arith.constant 0 : i32
    %c0_i32_0 = arith.constant 0 : i32
    %c0_i32_1 = arith.constant 0 : i32
    return %c0_i32, %c0_i32_0 : i32, i32
  }
  func.func @transform_3(%arg0: i32) -> (i32, i32) {
    %c0_i32 = arith.constant 0 : i32
    %c0_i32_0 = arith.constant 0 : i32
    return %arg0, %c0_i32 : i32, i32
  }
}

</mosaic_0001>

<llo_original>
// kernel: sine_layer.1
$region0: #{sine_layer.1}
  #allocation0 [shape = 'u32[]', space=smem, size = 0x4, offset = 0x4, fixed_abs, tag = 'smem constant byte address 0x4 - core index']
  #allocation1 [shape = 'u32[72,128]{1,0:T(1,128)}', space=vmem, size = 0x9000, scoped, tag = 'internal scratch']
  %s0 = inlined_call_operand.vmem [shape: f32[8,32], index: 0, kind: input, shape index: {}]
  %s1 = inlined_call_operand.vmem [shape: bf16[96,32], index: 1, kind: input, shape index: {}]
  %s2 = inlined_call_operand.vmem [shape: f32[1,32], index: 2, kind: input, shape index: {}]
  %s3 = inlined_call_operand.hbm [shape: f32[8,32], index: 3, kind: output, shape index: {}]
  %s4 = sld [smem:[#allocation0]]
  $region22: #{sine_layer.1} parent=0
    _
  %s6 = ssub.s32 1, %s4
  %s7 = scalar_select 0, %s6, %s4
  $region1: #{sine_layer.1} parent=0
    #allocation2 [shape = 'u8[4096]{0}', space=vmem, size = 0x1000, scoped, tag = 'output window, operand 0, single buffered']
    #allocation3 [shape = 's32[1]{0}', space=sflag, size = 0x4, scoped, tag = 'scoped memory for sine_layer.1']
    %8 = vsyncpa [#allocation3], 0
    // Predicated region
    $region2: #{sine_layer.1} parent=1 // pred_check
      _
    $region3: #{sine_layer.1} parent=1 // pred_check_branch
      %10 = sbr.rel (0) target = $region5
    $region4: #{sine_layer.1} parent=1 // pred_region
      _
    $region5: #{sine_layer.1} parent=1 // pred_fallthru
      _
    // Predicated region
    $region6: #{sine_layer.1} parent=1 // pred_check
      _
    $region7: #{sine_layer.1} parent=1 // pred_check_branch
      %12 = sbr.rel (0) target = $region9
    $region8: #{sine_layer.1} parent=1 // pred_region
      _
    $region9: #{sine_layer.1} parent=1 // pred_fallthru
      _
    // Predicated region
    $region10: #{sine_layer.1} parent=1 // pred_check
      _
    $region11: #{sine_layer.1} parent=1 // pred_check_branch
      %14 = sbr.rel (0) target = $region13
    $region12: #{sine_layer.1} parent=1 // pred_region
      _
    $region13: #{sine_layer.1} parent=1 // pred_fallthru
      _
    %v16 = vld [vmem:[%s0] sm:$0xff]
    %v17 = vand.u32 2147483647, %v16
    %vm18 = vcmp.le.f32.partialorder %v17, 0.7853982
    %vm19 = vcmp.lt.s32.totalorder %v16, 0
    %v20 = vand.u32 %v16, 2139095040
    %v21 = vshrl.u32 %v20, 23
    %v22 = vsub.s32 %v21, 127
    %v23 = vand.u32 2147483647, %v16
    %v24 = vand.u32 %v23, 8388607
    %v25 = vor.u32 %v24, 8388608
    %v26 = vsub.s32 0, %v25
    %v27 = vadd.s32 %v22, 1
    %vm28 = vcmp.gt.s32.totalorder %v27, 0
    %v29 = vsel %vm28, %v27, 0
    %v30 = vshrl.u32 %v29, 5
    %v31 = vand.u32 %v29, 31
    %v32 = vsub.s32 32, %v31
    %v33 = vshrl.u32 683565275, %v32
    %v34 = vshll.u32 683565275, %v31
    %v35 = vshrl.u32 2475754826, %v32
    %v36 = vor.u32 %v34, %v35
    %v37 = vshll.u32 2475754826, %v31
    %v38 = vshrl.u32 2131351028, %v32
    %v39 = vor.u32 %v37, %v38
    %v40 = vshll.u32 2131351028, %v31
    %v41 = vshrl.u32 2102212464, %v32
    %v42 = vor.u32 %v40, %v41
    %v43 = vshll.u32 2102212464, %v31
    %v44 = vshrl.u32 920167782, %v32
    %v45 = vor.u32 %v43, %v44
    %v46 = vshll.u32 920167782, %v31
    %v47 = vshrl.u32 1326507024, %v32
    %v48 = vor.u32 %v46, %v47
    %vm49 = vcmp.lt.s32.totalorder %v30, 1
    %vm50 = vcmp.lt.s32.totalorder %v30, 2
    %vm51 = vcmp.lt.s32.totalorder %v30, 3
    %vm52 = vcmp.lt.s32.totalorder %v30, 4
    %v53 = vsel %vm49, %v33, %v36
    %v54 = vsel %vm52, %v42, 2102212464
    %v55 = vsel %vm51, %v39, %v54
    %v56 = vsel %vm50, %v53, %v55
    %v57 = vsel %vm49, %v36, %v39
    %v58 = vsel %vm52, %v45, 920167782
    %v59 = vsel %vm51, %v42, %v58
    %v60 = vsel %vm50, %v57, %v59
    %v61 = vsel %vm49, %v39, %v42
    %v62 = vsel %vm52, %v48, 1326507024
    %v63 = vsel %vm51, %v45, %v62
    %v64 = vsel %vm50, %v61, %v63
    %v65 = vshll.u32 %v25, 8
    %v66 = vand.u32 %v65, 65535
    %v67 = vshrl.u32 %v65, 16
    %v68 = vand.u32 %v64, 65535
    %v69 = vshrl.u32 %v64, 16
    %v70 = vmul.u32 %v66, %v68
    %v71 = vmul.u32 %v66, %v69
    %v72 = vmul.u32 %v67, %v68
    %v73 = vmul.u32 %v67, %v69
    %v74 = vshll.u32 %v71, 16
    %v75 = vshrl.u32 %v71, 16
    %v76 = vshll.u32 %v72, 16
    %v77 = vshrl.u32 %v72, 16
    %vm78 = vc.u32 %v70, %v74
    %v79 = vsel %vm78, 1, 0
    %v80 = vadd.s32 %v70, %v74
    %v81 = vadd.s32 %v73, %v79
    %vm82 = vc.u32 %v80, %v76
    %v83 = vsel %vm82, 1, 0
    %v84 = vadd.s32 %v80, %v76
    %v85 = vadd.s32 %v81, %v83
    %v86 = vadd.s32 %v85, %v75
    %v87 = vadd.s32 %v86, %v77
    %v88 = vand.u32 %v65, 65535
    %v89 = vshrl.u32 %v65, 16
    %v90 = vand.u32 %v60, 65535
    %v91 = vshrl.u32 %v60, 16
    %v92 = vmul.u32 %v88, %v90
    %v93 = vmul.u32 %v88, %v91
    %v94 = vmul.u32 %v89, %v90
    %v95 = vmul.u32 %v89, %v91
    %v96 = vshll.u32 %v93, 16
    %v97 = vshrl.u32 %v93, 16
    %v98 = vshll.u32 %v94, 16
    %v99 = vshrl.u32 %v94, 16
    %vm100 = vc.u32 %v92, %v96
    %v101 = vsel %vm100, 1, 0
    %v102 = vadd.s32 %v92, %v96
    %v103 = vadd.s32 %v95, %v101
    %vm104 = vc.u32 %v102, %v98
    %v105 = vsel %vm104, 1, 0
    %v106 = vadd.s32 %v102, %v98
    %v107 = vadd.s32 %v103, %v105
    %v108 = vadd.s32 %v107, %v97
    %v109 = vadd.s32 %v108, %v99
    %v110 = vmul.u32 %v65, %v56
    %v111 = vadd.s32 %v87, %v106
    %vm112 = vc.u32 %v87, %v106
    %v113 = vadd.s32 %v109, 1
    %v114 = vsel %vm112, %v113, %v109
    %v115 = vadd.s32 %v110, %v114
    %v116 = vadd.s32 %v115, 536870912
    %v117 = vshrl.u32 %v116, 30
    %v118 = vshll.u32 %v117, 30
    %v119 = vsub.s32 %v115, %v118
    %vm120 = vcmp.lt.s32.totalorder %v119, 0
    %v121 = vsub.s32 0, %v119
    %v122 = vsel %vm120, %v121, %v119
    %v123 = vclz %v122
    %v124 = vsub.s32 %v123, 2
    %vm125 = vcmp.gt.s32.totalorder 0, %v124
    %v126 = vsel %vm125, 0, %v124
    %v127 = vsub.s32 32, %v126
    %v128 = vshll.u32 %v119, %v126
    %v129 = vshrl.u32 %v111, %v127
    %v130 = vor.u32 %v128, %v129
    %v131 = vsub.s32 4294967266, %v126
    %v132 = vadd.s32 %v131, 127
    %v133 = vshll.u32 %v132, 23
    %v134 = vor.u32 4788187, %v133
    %v135 = vand.u32 2147483647, %v134
    %v137 = vcvt.s32.f32 %v130
    %v138 = vmul.f32 %v137, %v135
    %v139 = vxor.u32 %v138, 2147483648
    %v140 = vsel %vm19, %v139, %v138
    %v141 = vsub.s32 4, %v117
    %v142 = vsel %vm19, %v141, %v117
    %v143 = vsel %vm18, %v16, %v140
    %v144 = vsel %vm18, 0, %v142
    %v145 = vmul.f32 %v143, %v143
    %v146 = vmul.f32 %v145, -0.001358992
    %v147 = vadd.f32 %v146, 0.041655596
    %v148 = vmul.f32 %v145, %v147
    %v149 = vadd.f32 %v148, -0.4999988
    %v150 = vmul.f32 %v145, %v149
    %v151 = vadd.f32 1.0, %v150
    %v152 = vmul.f32 %v143, %v143
    %v153 = vmul.f32 %v152, -0.00019511016
    %v154 = vadd.f32 %v153, 0.008332121
    %v155 = vmul.f32 %v152, %v154
    %v156 = vadd.f32 %v155, -0.16666654
    %v157 = vmul.f32 %v152, %v156
    %v158 = vadd.f32 %v157, 1.0
    %v159 = vmul.f32 %v158, %v143
    %vm160 = vweird.f32 %v16
    %v161 = vadd.s32 %v144, 3
    %v162 = vand.u32 %v161, 3
    %vm163 = vcmp.lt.s32.totalorder %v162, 2
    %vm164 = vcmp.eq.s32.totalorder %v162, 0
    %v165 = vxor.u32 %v159, 2147483648
    %v166 = vsel %vm164, %v151, %v165
    %vm167 = vcmp.eq.s32.totalorder %v162, 2
    %v168 = vxor.u32 %v151, 2147483648
    %v169 = vsel %vm167, %v168, %v159
    %v170 = vsel %vm163, %v166, %v169
    %v171 = vsel %vm160, nan, %v170
    %v172 = vand.u32 2147483647, %v16
    %vm173 = vcmp.le.f32.partialorder %v172, 0.7853982
    %vm174 = vcmp.lt.s32.totalorder %v16, 0
    %v175 = vand.u32 %v16, 2139095040
    %v176 = vshrl.u32 %v175, 23
    %v177 = vsub.s32 %v176, 127
    %v178 = vand.u32 2147483647, %v16
    %v179 = vand.u32 %v178, 8388607
    %v180 = vor.u32 %v179, 8388608
    %v181 = vsub.s32 0, %v180
    %v182 = vadd.s32 %v177, 1
    %vm183 = vcmp.gt.s32.totalorder %v182, 0
    %v184 = vsel %vm183, %v182, 0
    %v185 = vshrl.u32 %v184, 5
    %v186 = vand.u32 %v184, 31
    %v187 = vsub.s32 32, %v186
    %v188 = vshrl.u32 683565275, %v187
    %v189 = vshll.u32 683565275, %v186
    %v190 = vshrl.u32 2475754826, %v187
    %v191 = vor.u32 %v189, %v190
    %v192 = vshll.u32 2475754826, %v186
    %v193 = vshrl.u32 2131351028, %v187
    %v194 = vor.u32 %v192, %v193
    %v195 = vshll.u32 2131351028, %v186
    %v196 = vshrl.u32 2102212464, %v187
    %v197 = vor.u32 %v195, %v196
    %v198 = vshll.u32 2102212464, %v186
    %v199 = vshrl.u32 920167782, %v187
    %v200 = vor.u32 %v198, %v199
    %v201 = vshll.u32 920167782, %v186
    %v202 = vshrl.u32 1326507024, %v187
    %v203 = vor.u32 %v201, %v202
    %vm204 = vcmp.lt.s32.totalorder %v185, 1
    %vm205 = vcmp.lt.s32.totalorder %v185, 2
    %vm206 = vcmp.lt.s32.totalorder %v185, 3
    %vm207 = vcmp.lt.s32.totalorder %v185, 4
    %v208 = vsel %vm204, %v188, %v191
    %v209 = vsel %vm207, %v197, 2102212464
    %v210 = vsel %vm206, %v194, %v209
    %v211 = vsel %vm205, %v208, %v210
    %v212 = vsel %vm204, %v191, %v194
    %v213 = vsel %vm207, %v200, 920167782
    %v214 = vsel %vm206, %v197, %v213
    %v215 = vsel %vm205, %v212, %v214
    %v216 = vsel %vm204, %v194, %v197
    %v217 = vsel %vm207, %v203, 1326507024
    %v218 = vsel %vm206, %v200, %v217
    %v219 = vsel %vm205, %v216, %v218
    %v220 = vshll.u32 %v180, 8
    %v221 = vand.u32 %v220, 65535
    %v222 = vshrl.u32 %v220, 16
    %v223 = vand.u32 %v219, 65535
    %v224 = vshrl.u32 %v219, 16
    %v225 = vmul.u32 %v221, %v223
    %v226 = vmul.u32 %v221, %v224
    %v227 = vmul.u32 %v222, %v223
    %v228 = vmul.u32 %v222, %v224
    %v229 = vshll.u32 %v226, 16
    %v230 = vshrl.u32 %v226, 16
    %v231 = vshll.u32 %v227, 16
    %v232 = vshrl.u32 %v227, 16
    %vm233 = vc.u32 %v225, %v229
    %v234 = vsel %vm233, 1, 0
    %v235 = vadd.s32 %v225, %v229
    %v236 = vadd.s32 %v228, %v234
    %vm237 = vc.u32 %v235, %v231
    %v238 = vsel %vm237, 1, 0
    %v239 = vadd.s32 %v235, %v231
    %v240 = vadd.s32 %v236, %v238
    %v241 = vadd.s32 %v240, %v230
    %v242 = vadd.s32 %v241, %v232
    %v243 = vand.u32 %v220, 65535
    %v244 = vshrl.u32 %v220, 16
    %v245 = vand.u32 %v215, 65535
    %v246 = vshrl.u32 %v215, 16
    %v247 = vmul.u32 %v243, %v245
    %v248 = vmul.u32 %v243, %v246
    %v249 = vmul.u32 %v244, %v245
    %v250 = vmul.u32 %v244, %v246
    %v251 = vshll.u32 %v248, 16
    %v252 = vshrl.u32 %v248, 16
    %v253 = vshll.u32 %v249, 16
    %v254 = vshrl.u32 %v249, 16
    %vm255 = vc.u32 %v247, %v251
    %v256 = vsel %vm255, 1, 0
    %v257 = vadd.s32 %v247, %v251
    %v258 = vadd.s32 %v250, %v256
    %vm259 = vc.u32 %v257, %v253
    %v260 = vsel %vm259, 1, 0
    %v261 = vadd.s32 %v257, %v253
    %v262 = vadd.s32 %v258, %v260
    %v263 = vadd.s32 %v262, %v252
    %v264 = vadd.s32 %v263, %v254
    %v265 = vmul.u32 %v220, %v211
    %v266 = vadd.s32 %v242, %v261
    %vm267 = vc.u32 %v242, %v261
    %v268 = vadd.s32 %v264, 1
    %v269 = vsel %vm267, %v268, %v264
    %v270 = vadd.s32 %v265, %v269
    %v271 = vadd.s32 %v270, 536870912
    %v272 = vshrl.u32 %v271, 30
    %v273 = vshll.u32 %v272, 30
    %v274 = vsub.s32 %v270, %v273
    %vm275 = vcmp.lt.s32.totalorder %v274, 0
    %v276 = vsub.s32 0, %v274
    %v277 = vsel %vm275, %v276, %v274
    %v278 = vclz %v277
    %v279 = vsub.s32 %v278, 2
    %vm280 = vcmp.gt.s32.totalorder 0, %v279
    %v281 = vsel %vm280, 0, %v279
    %v282 = vsub.s32 32, %v281
    %v283 = vshll.u32 %v274, %v281
    %v284 = vshrl.u32 %v266, %v282
    %v285 = vor.u32 %v283, %v284
    %v286 = vsub.s32 4294967266, %v281
    %v287 = vadd.s32 %v286, 127
    %v288 = vshll.u32 %v287, 23
    %v289 = vor.u32 4788187, %v288
    %v290 = vand.u32 2147483647, %v289
    %v292 = vcvt.s32.f32 %v285
    %v293 = vmul.f32 %v292, %v290
    %v294 = vxor.u32 %v293, 2147483648
    %v295 = vsel %vm174, %v294, %v293
    %v296 = vsub.s32 4, %v272
    %v297 = vsel %vm174, %v296, %v272
    %v298 = vsel %vm173, %v16, %v295
    %v299 = vsel %vm173, 0, %v297
    %v300 = vmul.f32 %v298, %v298
    %v301 = vmul.f32 %v300, -0.001358992
    %v302 = vadd.f32 %v301, 0.041655596
    %v303 = vmul.f32 %v300, %v302
    %v304 = vadd.f32 %v303, -0.4999988
    %v305 = vmul.f32 %v300, %v304
    %v306 = vadd.f32 1.0, %v305
    %v307 = vmul.f32 %v298, %v298
    %v308 = vmul.f32 %v307, -0.00019511016
    %v309 = vadd.f32 %v308, 0.008332121
    %v310 = vmul.f32 %v307, %v309
    %v311 = vadd.f32 %v310, -0.16666654
    %v312 = vmul.f32 %v307, %v311
    %v313 = vadd.f32 %v312, 1.0
    %v314 = vmul.f32 %v313, %v298
    %vm315 = vweird.f32 %v16
    %v316 = vand.u32 %v299, 3
    %vm317 = vcmp.lt.s32.totalorder %v316, 2
    %vm318 = vcmp.eq.s32.totalorder %v316, 0
    %v319 = vxor.u32 %v314, 2147483648
    %v320 = vsel %vm318, %v306, %v319
    %vm321 = vcmp.eq.s32.totalorder %v316, 2
    %v322 = vxor.u32 %v306, 2147483648
    %v323 = vsel %vm321, %v322, %v314
    %v324 = vsel %vm317, %v320, %v323
    %v325 = vsel %vm315, nan, %v324
    %v326 = vmul.f32 %v171, 2.0
    %v327 = vmul.f32 %v326, %v325
    %v328 = vmul.f32 %v171, %v171
    %v329 = vmul.f32 %v328, 4.0
    %v330 = vsub.f32 3.0, %v329
    %v331 = vmul.f32 %v171, %v330
    %v332 = vpack.c.bf16 %v171, %v171
    %v333 = vld [vmem:[%s1] sm:$0xf]
    %v334 = vld [vmem:[%s1 + $0x4] sm:$0xf]
    %v335 = vld [vmem:[%s1 + $0x8] sm:$0xf]
    %v336 = vld [vmem:[%s1 + $0xc] sm:$0xf]
    %v337 = vpack.c.bf16 %v327, %v327
    %v338 = vld [vmem:[%s1 + $0x10] sm:$0xf]
    %v339 = vld [vmem:[%s1 + $0x14] sm:$0xf]
    %v340 = vld [vmem:[%s1 + $0x18] sm:$0xf]
    %v341 = vld [vmem:[%s1 + $0x1c] sm:$0xf]
    %v346 = vunpack.c.l.b16 %v338
    %v347 = vunpack.c.l.b16 %v339
    %v348 = vunpack.c.l.b16 %v340
    %v349 = vunpack.c.l.b16 %v341
    %v350 = vpack.c.b16 %v347, %v346
    %v351 = vpack.c.b16 %v349, %v348
    %vm354 = vcmask 261120
    %v356 = vsel %vm354, %v337, 0
    %358 = vmatpush.bf16.msra.mxu0 0
    %359 = vmatpush.bf16.msra.mxu0 0
    %360 = vmatpush.bf16.msra.mxu0 0
    %361 = vmatpush.bf16.msra.mxu0 0
    %362 = vmatpush.bf16.msra.mxu0 0
    %363 = vmatpush.bf16.msra.mxu0 0
    %364 = vmatpush.bf16.msra.mxu0 %v351
    %365 = vmatpush.bf16.msra.mxu0 %v350
    %366 = vmatmul.bf16.gmra.mxu0 %v356
    %v367 = vpop.f32.mrf.mxu0
    %v368 = vadd.f32 0.0, %v367
    %v369 = vpop.f32.mrf.mxu0
    %370 = vdwg.mxu0
    %v375 = vunpack.c.l.b16 %v333
    %v376 = vunpack.c.l.b16 %v334
    %v377 = vunpack.c.l.b16 %v335
    %v378 = vunpack.c.l.b16 %v336
    %v379 = vpack.c.b16 %v376, %v375
    %v380 = vpack.c.b16 %v378, %v377
    %v384 = vsel %vm354, %v332, 0
    %386 = vmatpush.bf16.msra.mxu0 0
    %387 = vmatpush.bf16.msra.mxu0 0
    %388 = vmatpush.bf16.msra.mxu0 0
    %389 = vmatpush.bf16.msra.mxu0 0
    %390 = vmatpush.bf16.msra.mxu0 0
    %391 = vmatpush.bf16.msra.mxu0 0
    %392 = vmatpush.bf16.msra.mxu0 %v380
    %393 = vmatpush.bf16.msra.mxu0 %v379
    %394 = vmatmul.bf16.gmra.mxu0 %v384
    %v395 = vpop.f32.mrf.mxu0
    %v396 = vadd.f32 %v368, %v395
    %v397 = vpop.f32.mrf.mxu0
    %398 = vdwg.mxu0
    %v399 = vpack.c.bf16 %v331, %v331
    %v400 = vld [vmem:[%s1 + $0x20] sm:$0xf]
    %v401 = vld [vmem:[%s1 + $0x24] sm:$0xf]
    %v402 = vld [vmem:[%s1 + $0x28] sm:$0xf]
    %v403 = vld [vmem:[%s1 + $0x2c] sm:$0xf]
    %v408 = vunpack.c.l.b16 %v400
    %v409 = vunpack.c.l.b16 %v401
    %v410 = vunpack.c.l.b16 %v402
    %v411 = vunpack.c.l.b16 %v403
    %v412 = vpack.c.b16 %v409, %v408
    %v413 = vpack.c.b16 %v411, %v410
    %v417 = vsel %vm354, %v399, 0
    %419 = vmatpush.bf16.msra.mxu0 0
    %420 = vmatpush.bf16.msra.mxu0 0
    %421 = vmatpush.bf16.msra.mxu0 0
    %422 = vmatpush.bf16.msra.mxu0 0
    %423 = vmatpush.bf16.msra.mxu0 0
    %424 = vmatpush.bf16.msra.mxu0 0
    %425 = vmatpush.bf16.msra.mxu0 %v413
    %426 = vmatpush.bf16.msra.mxu0 %v412
    %427 = vmatmul.bf16.gmra.mxu0 %v417
    %v428 = vpop.f32.mrf.mxu0
    %v429 = vadd.f32 0.0, %v428
    %v430 = vpop.f32.mrf.mxu0
    %431 = vdwg.mxu0
    %v432 = vadd.f32 %v396, %v429
    %v433 = vld [vmem:[%s2] sm:$0x1]
    %v435 = vperm.slane %v433, 0
    %v437 = vadd.f32 %v432, %v435
    %438 = vst.msk [vmem:[#allocation2] sm:$0xff] %vm354, %v437
    // Predicated region
    $region14: #{sine_layer.1} parent=1 // pred_check
      _
    $region15: #{sine_layer.1} parent=1 // pred_check_branch
      %440 = sbr.rel (0) target = $region17
    $region16: #{sine_layer.1} parent=1 // pred_region
      %442 = vsyncadd [#allocation3], 0
      %s444 = sshll.u32 [#allocation2], 4
      %s445 = int_to_ptr.vmem [resolvable:$true] %s444
      %s446 = sshll.u32 %s3, 4
      %s447 = int_to_ptr.hbm [resolvable:$true] %s446
      %449 = dma.vmem_to_hbm [thread:$0]  %s445, 128, %s447, [#allocation3]
    $region17: #{sine_layer.1} parent=1 // pred_fallthru
      _
    // Predicated region
    $region18: #{sine_layer.1} parent=1 // pred_check
      _
    $region19: #{sine_layer.1} parent=1 // pred_check_branch
      %451 = sbr.rel (0) target = $region21
    $region20: #{sine_layer.1} parent=1 // pred_region
      %453 = dma.done [#allocation3], 128
    $region21: #{sine_layer.1} parent=1 // pred_fallthru
      _
    %454 = vsyncpa [#allocation3], 1

</llo_original>
